<compile_context>
chip_gen: v7x
topology: tpu7x:2x2x1
jax: 0.10.0
libtpu: 0.0.40
codegen_flags: <defaults>
</compile_context>

<pallas_src>
import functools

import jax
import jax.numpy as jnp
from jax import lax
from jax.experimental import pallas as pl
from jax.experimental.pallas import tpu as pltpu


_SQRT_HALF = 0.7071067811865476


def _erf_f32(x):
    """erf via Abramowitz & Stegun 7.1.26 (|error| <= 1.5e-7).

    Uses only exp / mul / add / where so it lowers cleanly in Pallas TPU
    (no reliance on a lax.erf lowering rule); exp lands on the EUP slot,
    the polynomial on the VPU.
    """
    p = 0.3275911
    a1, a2, a3, a4, a5 = (0.254829592, -0.284496736, 1.421413741,
                          -1.453152027, 1.061405429)
    z = jnp.abs(x)
    t = 1.0 / (1.0 + p * z)
    poly = t * (a1 + t * (a2 + t * (a3 + t * (a4 + t * a5))))
    e = 1.0 - poly * jnp.exp(-z * z)
    return jnp.where(x < 0, -e, e)


def _gelu(x, approximate):
    if approximate:
        # tanh GELU (EUP); deviates ~1e-3 from torch.nn.GELU() exact.
        return jax.nn.gelu(x, approximate=True)
    return 0.5 * x * (1.0 + _erf_f32(x * _SQRT_HALF))


def _adapter_kernel(x_ref, w1_ref, b1_ref, w2_ref, b2_ref, o_ref, *, approximate):
    # x_ref:  (tm, Cin)    w1_ref: (Cin, H)   b1_ref: (1, H)
    # w2_ref: (H, Cout)    b2_ref: (1, Cout)  o_ref:  (tm, Cout)
    x = x_ref[...]                              # native dtype straight to MXU
    h = jnp.dot(x, w1_ref[...], preferred_element_type=jnp.float32,
                precision=lax.Precision.HIGHEST)
    h = h + b1_ref[...].astype(jnp.float32)
    h = _gelu(h, approximate)
    h = h.astype(w2_ref.dtype)                  # bf16 weights -> fast MXU pass
    y = jnp.dot(h, w2_ref[...], preferred_element_type=jnp.float32,
                precision=lax.Precision.HIGHEST)
    y = y + b2_ref[...].astype(jnp.float32)
    o_ref[...] = y.astype(o_ref.dtype)


def init_adapter_params(key, in_features, out_features, mlp_ratio=0.25,
                        dtype=jnp.float32):
    """nn.Linear-default init (uniform +-1/sqrt(fan_in)).

    Weights are stored transposed w.r.t. PyTorch: (fan_in, fan_out), matching
    the x @ W convention used in the kernel.
    """
    hidden = int(in_features * mlp_ratio)
    k1, k2, k3, k4 = jax.random.split(key, 4)
    lim1 = 1.0 / jnp.sqrt(in_features)
    lim2 = 1.0 / jnp.sqrt(hidden)
    w1 = jax.random.uniform(k1, (in_features, hidden), dtype, -lim1, lim1)
    b1 = jax.random.uniform(k2, (hidden,), dtype, -lim1, lim1)
    w2 = jax.random.uniform(k3, (hidden, out_features), dtype, -lim2, lim2)
    b2 = jax.random.uniform(k4, (out_features,), dtype, -lim2, lim2)
    return w1, b1, w2, b2


def prepare_adapter_params(w1, b1, w2, b2):
    """Precompute (once) the lane-density-folded block-diagonal weights.

    Folding packs `fold` consecutive rows of x into the 128-wide lane axis so
    the kernel's input loads and output stores are full-lane (unmasked) and
    the first matmul's K grows from in_f to fold*in_f.  Doing the kron/tile
    here keeps them off the per-call launch critical path.
    """
    in_f, hid = w1.shape
    out_f = w2.shape[1]
    assert w2.shape[0] == hid and b1.shape == (hid,) and b2.shape == (out_f,)

    fold = 1
    if in_f <= 128 and out_f <= 128 and 128 % in_f == 0 and 128 % out_f == 0:
        fold = min(128 // in_f, 128 // out_f)

    params = {
        "in_f": in_f, "hid": hid, "out_f": out_f, "fold": fold,
        "raw": (w1, b1.reshape(1, hid), w2, b2.reshape(1, out_f)),
    }
    if fold > 1:
        eye = jnp.eye(fold, dtype=w1.dtype)
        params["folded"] = (
            jnp.kron(eye, w1),                         # (fold*in_f, fold*hid)
            jnp.tile(b1.reshape(1, hid), (1, fold)),   # (1, fold*hid)
            jnp.kron(eye, w2),                         # (fold*hid, fold*out_f)
            jnp.tile(b2.reshape(1, out_f), (1, fold)),  # (1, fold*out_f)
        )
    return params


def _round_up8(v):
    return ((v + 7) // 8) * 8


def adapter_forward(x, params, *, tm=None, gelu_approximate=False):
    """x: (B, S, in_features) -> (B, S, out_features)."""
    B, S, in_f = x.shape
    hid, out_f = params["hid"], params["out_f"]
    assert params["in_f"] == in_f

    M = B * S
    fold = params["fold"]
    if fold > 1 and M % fold == 0:
        w1_k, b1_k, w2_k, b2_k = params["folded"]
        Mf = M // fold
    else:
        # No fold: avoids the pad + slice HBM round-trip when B*S % fold != 0.
        fold = 1
        w1_k, b1_k, w2_k, b2_k = params["raw"]
        Mf = M
    cin, ch, cout = fold * in_f, fold * hid, fold * out_f
    xk = x.reshape(Mf, cin)

    # ---- Row tile selection -------------------------------------------------
    # Big tiles amortize the ~0.35 us per-grid-step overhead (HBM-bound
    # kernel); keep >= 2 grid steps so both v7x TensorCores get work and
    # input/output DMA pipelines against compute, preferring >= 8 steps once
    # tiles can stay >= 1024 rows (~512 KiB f32).
    if tm is None:
        tm = min(Mf, 4096)      # 4096 rows f32 => ~8 MiB double-buffered total:
                                # fits v5e 16 MiB / v6e-v7x 32 MiB scoped VMEM.
        if Mf >= 16:
            cap = _round_up8(pl.cdiv(Mf, 8))
            if cap < 1024:
                cap = _round_up8(pl.cdiv(Mf, 2))
            tm = min(tm, cap)
    tm = max(1, min(int(tm), Mf))
    if tm != Mf:
        tm = max(8, (tm // 8) * 8)
    grid = (pl.cdiv(Mf, tm),)

    # Advisory cost estimate for XLA's scheduler (bandwidth-bound kernel).
    itemsize = jnp.dtype(x.dtype).itemsize
    w_itemsize = jnp.dtype(w1_k.dtype).itemsize
    cost = pl.CostEstimate(
        flops=2 * M * (in_f * hid + hid * out_f),
        transcendentals=M * hid,
        bytes_accessed=itemsize * M * (in_f + out_f)
        + w_itemsize * (cin * ch + ch * cout + ch + cout),
    )

    # Only raise the scoped-VMEM limit if an unusually large user-supplied tm
    # needs it (never triggered by the defaults above); cap well under v7x's
    # 64 MiB physical VMEM.
    vmem_need = 2 * tm * (cin + cout) * itemsize + 4 * (cin * ch + ch * cout)
    cp_kwargs = dict(dimension_semantics=("parallel",))
    if vmem_need > 12 * 1024 * 1024:
        cp_kwargs["vmem_limit_bytes"] = int(min(2 * vmem_need, 60 * 1024 * 1024))

    kernel = functools.partial(_adapter_kernel, approximate=gelu_approximate)
    outk = pl.pallas_call(
        kernel,
        out_shape=jax.ShapeDtypeStruct((Mf, cout), x.dtype),
        grid_spec=pltpu.PrefetchScalarGridSpec(
            num_scalar_prefetch=0,
            grid=grid,
            in_specs=[
                pl.BlockSpec((tm, cin), lambda i: (i, 0)),    # x rows (streamed)
                pl.BlockSpec((cin, ch), lambda i: (0, 0)),    # W1 (resident)
                pl.BlockSpec((1, ch), lambda i: (0, 0)),      # b1
                pl.BlockSpec((ch, cout), lambda i: (0, 0)),   # W2 (resident)
                pl.BlockSpec((1, cout), lambda i: (0, 0)),    # b2
            ],
            out_specs=pl.BlockSpec((tm, cout), lambda i: (i, 0)),
        ),
        compiler_params=pltpu.CompilerParams(**cp_kwargs),
        cost_estimate=cost,
    )(xk, w1_k, b1_k, w2_k, b2_k)

    return outk.reshape(B, S, out_f)


def adapter_reference(x, w1, b1, w2, b2):
    """Pure-JAX reference of the Adapter forward (exact GELU, full f32 dots)."""
    h = jnp.dot(x, w1, precision=lax.Precision.HIGHEST) + b1
    h = jax.nn.gelu(h, approximate=False)
    return jnp.dot(h, w2, precision=lax.Precision.HIGHEST) + b2


if __name__ == "__main__":
    key = jax.random.PRNGKey(0)
    kx, kp = jax.random.split(key)

    B, S, in_features, out_features = 2, 8, 32, 32  # hidden = int(32*0.25) = 8
    x = jax.random.normal(kx, (B, S, in_features), dtype=jnp.float32)
    w1, b1, w2, b2 = init_adapter_params(kp, in_features, out_features, 0.25)
    params = prepare_adapter_params(w1, b1, w2, b2)   # fold precomputed once

    # Small case (folded, single-tile grid), strict parity with exact GELU.
    out = jax.block_until_ready(adapter_forward(x, params))
    ref = adapter_reference(x, w1, b1, w2, b2)
    assert out.shape == (B, S, out_features)
    assert jnp.allclose(out, ref, atol=1e-4, rtol=1e-4)

    # Multi-tile case (M % 4 == 0 -> lane-dense fold, grid > 1, explicit tm).
    x_big = jax.random.normal(kx, (4, 1024, in_features), dtype=jnp.float32)
    out_big = jax.block_until_ready(adapter_forward(x_big, params, tm=256))
    ref_big = adapter_reference(x_big, w1, b1, w2, b2)
    assert jnp.allclose(out_big, ref_big, atol=1e-4, rtol=1e-4)

    # M % 4 != 0 -> fold=1 fallback (no pad/slice round-trip), default tm,
    # partial last tile.
    x_odd = jax.random.normal(kx, (3, 701, in_features), dtype=jnp.float32)
    out_odd = jax.block_until_ready(adapter_forward(x_odd, params))
    ref_odd = adapter_reference(x_odd, w1, b1, w2, b2)
    assert jnp.allclose(out_odd, ref_odd, atol=1e-4, rtol=1e-4)

    # Opt-in tanh-approximate GELU (EUP path; looser tolerance vs exact).
    out_apx = jax.block_until_ready(
        adapter_forward(x, params, gelu_approximate=True))
    assert jnp.allclose(out_apx, ref, atol=2e-2, rtol=2e-2)

    # Opt-in bf16 I/O + weights (halves HBM traffic; looser tolerance).
    params_bf16 = prepare_adapter_params(
        *(a.astype(jnp.bfloat16) for a in (w1, b1, w2, b2)))
    out_bf16 = jax.block_until_ready(
        adapter_forward(x_big.astype(jnp.bfloat16), params_bf16))
    assert jnp.allclose(out_bf16.astype(jnp.float32), ref_big,
                        atol=1e-1, rtol=1e-1)

    print("KERNEL_OK")
</pallas_src>

<mosaic_0001>
module attributes {stable_mosaic.version = 11 : i64} {
  func.func @_adapter_kernel(%arg0: i32, %arg1: memref<4x128xf32, #tpu.memory_space<vmem>>, %arg2: memref<128x32xf32, #tpu.memory_space<vmem>>, %arg3: memref<1x32xf32, #tpu.memory_space<vmem>>, %arg4: memref<32x128xf32, #tpu.memory_space<vmem>>, %arg5: memref<1x128xf32, #tpu.memory_space<vmem>>, %arg6: memref<4x128xf32, #tpu.memory_space<vmem>>) attributes {dimension_semantics = [#tpu.dimension_semantics<parallel>], iteration_bounds = array<i64: 1>, scalar_prefetch = 0 : i64, scratch_operands = 0 : i64, tpu.core_type = #tpu.core_type<tc>, window_params = [{transform_indices = @transform_0, window_bounds = array<i64: 4, 128>}, {pipeline_mode = #tpu.pipeline_mode<synchronous>, transform_indices = @transform_1, window_bounds = array<i64: 128, 32>}, {pipeline_mode = #tpu.pipeline_mode<synchronous>, transform_indices = @transform_2, window_bounds = array<i64: 1, 32>}, {pipeline_mode = #tpu.pipeline_mode<synchronous>, transform_indices = @transform_3, window_bounds = array<i64: 32, 128>}, {pipeline_mode = #tpu.pipeline_mode<synchronous>, transform_indices = @transform_4, window_bounds = array<i64: 1, 128>}, {transform_indices = @transform_5, window_bounds = array<i64: 4, 128>}]} {
    %c0 = arith.constant 0 : index
    %c0_0 = arith.constant 0 : index
    %0 = vector.load %arg1[%c0, %c0_0] : memref<4x128xf32, #tpu.memory_space<vmem>>, vector<4x128xf32>
    %c0_1 = arith.constant 0 : index
    %c0_2 = arith.constant 0 : index
    %1 = vector.load %arg2[%c0_1, %c0_2] : memref<128x32xf32, #tpu.memory_space<vmem>>, vector<128x32xf32>
    %cst = arith.constant dense<0.000000e+00> : vector<4x32xf32>
    %2 = tpu.matmul %0, %1, %cst {dimension_numbers = #tpu.dot_dimension_numbers<[1], [0], [0], [1], [0, 0, 1, 1], [], []>, precision = #tpu.contract_precision<fp32>} : vector<4x128xf32>, vector<128x32xf32>, vector<4x32xf32> -> vector<4x32xf32>
    %c0_3 = arith.constant 0 : index
    %c0_4 = arith.constant 0 : index
    %3 = vector.load %arg3[%c0_3, %c0_4] : memref<1x32xf32, #tpu.memory_space<vmem>>, vector<1x32xf32>
    %4 = vector.broadcast %3 : vector<1x32xf32> to vector<4x32xf32>
    %5 = arith.addf %2, %4 : vector<4x32xf32>
    %cst_5 = arith.constant 5.000000e-01 : f32
    %6 = vector.broadcast %cst_5 : f32 to vector<4x32xf32>
    %7 = arith.mulf %6, %5 : vector<4x32xf32>
    %cst_6 = arith.constant 0.707106769 : f32
    %8 = vector.broadcast %cst_6 : f32 to vector<4x32xf32>
    %9 = arith.mulf %5, %8 : vector<4x32xf32>
    %10 = math.absf %9 : vector<4x32xf32>
    %cst_7 = arith.constant 0.327591091 : f32
    %11 = vector.broadcast %cst_7 : f32 to vector<4x32xf32>
    %12 = arith.mulf %11, %10 : vector<4x32xf32>
    %cst_8 = arith.constant 1.000000e+00 : f32
    %13 = vector.broadcast %cst_8 : f32 to vector<4x32xf32>
    %14 = arith.addf %13, %12 : vector<4x32xf32>
    %cst_9 = arith.constant 1.000000e+00 : f32
    %15 = vector.broadcast %cst_9 : f32 to vector<4x32xf32>
    %16 = arith.divf %15, %14 : vector<4x32xf32>
    %cst_10 = arith.constant 1.06140542 : f32
    %17 = vector.broadcast %cst_10 : f32 to vector<4x32xf32>
    %18 = arith.mulf %16, %17 : vector<4x32xf32>
    %cst_11 = arith.constant -1.45315206 : f32
    %19 = vector.broadcast %cst_11 : f32 to vector<4x32xf32>
    %20 = arith.addf %19, %18 : vector<4x32xf32>
    %21 = arith.mulf %16, %20 : vector<4x32xf32>
    %cst_12 = arith.constant 1.42141378 : f32
    %22 = vector.broadcast %cst_12 : f32 to vector<4x32xf32>
    %23 = arith.addf %22, %21 : vector<4x32xf32>
    %24 = arith.mulf %16, %23 : vector<4x32xf32>
    %cst_13 = arith.constant -0.284496725 : f32
    %25 = vector.broadcast %cst_13 : f32 to vector<4x32xf32>
    %26 = arith.addf %25, %24 : vector<4x32xf32>
    %27 = arith.mulf %16, %26 : vector<4x32xf32>
    %cst_14 = arith.constant 0.254829586 : f32
    %28 = vector.broadcast %cst_14 : f32 to vector<4x32xf32>
    %29 = arith.addf %28, %27 : vector<4x32xf32>
    %30 = arith.mulf %16, %29 : vector<4x32xf32>
    %cst_15 = arith.constant 0.000000e+00 : f32
    %31 = vector.broadcast %cst_15 : f32 to vector<4x32xf32>
    %32 = arith.subf %31, %10 : vector<4x32xf32>
    %33 = arith.mulf %32, %10 : vector<4x32xf32>
    %34 = math.exp %33 : vector<4x32xf32>
    %35 = arith.mulf %30, %34 : vector<4x32xf32>
    %cst_16 = arith.constant 1.000000e+00 : f32
    %36 = vector.broadcast %cst_16 : f32 to vector<4x32xf32>
    %37 = arith.subf %36, %35 : vector<4x32xf32>
    %cst_17 = arith.constant 0.000000e+00 : f32
    %38 = vector.broadcast %cst_17 : f32 to vector<4x32xf32>
    %39 = arith.cmpf olt, %9, %38 : vector<4x32xf32>
    %cst_18 = arith.constant 0.000000e+00 : f32
    %40 = vector.broadcast %cst_18 : f32 to vector<4x32xf32>
    %41 = arith.subf %40, %37 : vector<4x32xf32>
    %42 = arith.select %39, %41, %37 : vector<4x32xi1>, vector<4x32xf32>
    %cst_19 = arith.constant 1.000000e+00 : f32
    %43 = vector.broadcast %cst_19 : f32 to vector<4x32xf32>
    %44 = arith.addf %43, %42 : vector<4x32xf32>
    %45 = arith.mulf %7, %44 : vector<4x32xf32>
    %c0_20 = arith.constant 0 : index
    %c0_21 = arith.constant 0 : index
    %46 = vector.load %arg4[%c0_20, %c0_21] : memref<32x128xf32, #tpu.memory_space<vmem>>, vector<32x128xf32>
    %cst_22 = arith.constant dense<0.000000e+00> : vector<4x128xf32>
    %47 = tpu.matmul %45, %46, %cst_22 {dimension_numbers = #tpu.dot_dimension_numbers<[1], [0], [0], [1], [0, 0, 1, 1], [], []>, precision = #tpu.contract_precision<fp32>} : vector<4x32xf32>, vector<32x128xf32>, vector<4x128xf32> -> vector<4x128xf32>
    %c0_23 = arith.constant 0 : index
    %c0_24 = arith.constant 0 : index
    %48 = vector.load %arg5[%c0_23, %c0_24] : memref<1x128xf32, #tpu.memory_space<vmem>>, vector<1x128xf32>
    %49 = vector.broadcast %48 : vector<1x128xf32> to vector<4x128xf32>
    %50 = arith.addf %47, %49 : vector<4x128xf32>
    %c0_25 = arith.constant 0 : index
    %c0_26 = arith.constant 0 : index
    %51 = vector.load %arg6[%c0_25, %c0_26] : memref<4x128xf32, #tpu.memory_space<vmem>>, vector<4x128xf32>
    tpu.vector_store %arg6[%c0_25, %c0_26], %50 {strides = array<i32>} : memref<4x128xf32, #tpu.memory_space<vmem>>, vector<4x128xf32>,
    return
  }
  func.func @transform_0(%arg0: i32) -> (i32, i32) {
    %c0_i32 = arith.constant 0 : i32
    %c0_i32_0 = arith.constant 0 : i32
    return %arg0, %c0_i32 : i32, i32
  }
  func.func @transform_1(%arg0: i32) -> (i32, i32) {
    %c0_i32 = arith.constant 0 : i32
    %c0_i32_0 = arith.constant 0 : i32
    %c0_i32_1 = arith.constant 0 : i32
    return %c0_i32, %c0_i32_0 : i32, i32
  }
  func.func @transform_2(%arg0: i32) -> (i32, i32) {
    %c0_i32 = arith.constant 0 : i32
    %c0_i32_0 = arith.constant 0 : i32
    %c0_i32_1 = arith.constant 0 : i32
    return %c0_i32, %c0_i32_0 : i32, i32
  }
  func.func @transform_3(%arg0: i32) -> (i32, i32) {
    %c0_i32 = arith.constant 0 : i32
    %c0_i32_0 = arith.constant 0 : i32
    %c0_i32_1 = arith.constant 0 : i32
    return %c0_i32, %c0_i32_0 : i32, i32
  }
  func.func @transform_4(%arg0: i32) -> (i32, i32) {
    %c0_i32 = arith.constant 0 : i32
    %c0_i32_0 = arith.constant 0 : i32
    %c0_i32_1 = arith.constant 0 : i32
    return %c0_i32, %c0_i32_0 : i32, i32
  }
  func.func @transform_5(%arg0: i32) -> (i32, i32) {
    %c0_i32 = arith.constant 0 : i32
    %c0_i32_0 = arith.constant 0 : i32
    return %arg0, %c0_i32 : i32, i32
  }
}

</mosaic_0001>

<llo_original>
// kernel: tpu_custom_call.1
$region0: #{tpu_custom_call.1}
  #allocation0 [shape = 'u32[]', space=smem, size = 0x4, offset = 0x4, fixed_abs, tag = 'smem constant byte address 0x4 - core index']
  #allocation1 [shape = 'u32[144,128]{1,0:T(1,128)}', space=vmem, size = 0x12000, scoped, tag = 'internal scratch']
  %s0 = inlined_call_operand.vmem [shape: f32[4,128], index: 0, kind: input, shape index: {}]
  %s1 = inlined_call_operand.vmem [shape: f32[128,32], index: 1, kind: input, shape index: {}]
  %s2 = inlined_call_operand.vmem [shape: f32[1,32], index: 2, kind: input, shape index: {}]
  %s3 = inlined_call_operand.vmem [shape: f32[32,128], index: 3, kind: input, shape index: {}]
  %s4 = inlined_call_operand.vmem [shape: f32[1,128], index: 4, kind: input, shape index: {}]
  %s5 = inlined_call_operand.hbm [shape: f32[4,128], index: 5, kind: output, shape index: {}]
  %s6 = sld [smem:[#allocation0]]
  $region30: #{tpu_custom_call.1} parent=0
    _
  %s8 = ssub.s32 1, %s6
  %s9 = scalar_select 0, %s8, %s6
  $region1: #{tpu_custom_call.1} parent=0
    #allocation2 [shape = 'u8[2048]{0}', space=vmem, size = 0x800, scoped, tag = 'output window, operand 0, single buffered']
    #allocation3 [shape = 's32[1]{0}', space=sflag, size = 0x4, scoped, tag = 'scoped memory for tpu_custom_call.1']
    %10 = vsyncpa [#allocation3], 0
    // Predicated region
    $region2: #{tpu_custom_call.1} parent=1 // pred_check
      _
    $region3: #{tpu_custom_call.1} parent=1 // pred_check_branch
      %12 = sbr.rel (0) target = $region5
    $region4: #{tpu_custom_call.1} parent=1 // pred_region
      _
    $region5: #{tpu_custom_call.1} parent=1 // pred_fallthru
      _
    // Predicated region
    $region6: #{tpu_custom_call.1} parent=1 // pred_check
      _
    $region7: #{tpu_custom_call.1} parent=1 // pred_check_branch
      %14 = sbr.rel (0) target = $region9
    $region8: #{tpu_custom_call.1} parent=1 // pred_region
      _
    $region9: #{tpu_custom_call.1} parent=1 // pred_fallthru
      _
    // Predicated region
    $region10: #{tpu_custom_call.1} parent=1 // pred_check
      _
    $region11: #{tpu_custom_call.1} parent=1 // pred_check_branch
      %16 = sbr.rel (0) target = $region13
    $region12: #{tpu_custom_call.1} parent=1 // pred_region
      _
    $region13: #{tpu_custom_call.1} parent=1 // pred_fallthru
      _
    // Predicated region
    $region14: #{tpu_custom_call.1} parent=1 // pred_check
      _
    $region15: #{tpu_custom_call.1} parent=1 // pred_check_branch
      %18 = sbr.rel (0) target = $region17
    $region16: #{tpu_custom_call.1} parent=1 // pred_region
      _
    $region17: #{tpu_custom_call.1} parent=1 // pred_fallthru
      _
    // Predicated region
    $region18: #{tpu_custom_call.1} parent=1 // pred_check
      _
    $region19: #{tpu_custom_call.1} parent=1 // pred_check_branch
      %20 = sbr.rel (0) target = $region21
    $region20: #{tpu_custom_call.1} parent=1 // pred_region
      _
    $region21: #{tpu_custom_call.1} parent=1 // pred_fallthru
      _
    %v21 = vld [vmem:[%s0] sm:$0xf]
    %v22 = vld [vmem:[%s1] sm:$0xff]
    %v23 = vld [vmem:[%s1 + $0x8] sm:$0xff]
    %v24 = vld [vmem:[%s1 + $0x10] sm:$0xff]
    %v25 = vld [vmem:[%s1 + $0x18] sm:$0xff]
    %v26 = vld [vmem:[%s1 + $0x20] sm:$0xff]
    %v27 = vld [vmem:[%s1 + $0x28] sm:$0xff]
    %v28 = vld [vmem:[%s1 + $0x30] sm:$0xff]
    %v29 = vld [vmem:[%s1 + $0x38] sm:$0xff]
    %v30 = vld [vmem:[%s1 + $0x40] sm:$0xff]
    %v31 = vld [vmem:[%s1 + $0x48] sm:$0xff]
    %v32 = vld [vmem:[%s1 + $0x50] sm:$0xff]
    %v33 = vld [vmem:[%s1 + $0x58] sm:$0xff]
    %v34 = vld [vmem:[%s1 + $0x60] sm:$0xff]
    %v35 = vld [vmem:[%s1 + $0x68] sm:$0xff]
    %v36 = vld [vmem:[%s1 + $0x70] sm:$0xff]
    %v37 = vld [vmem:[%s1 + $0x78] sm:$0xff]
    %v38 = vld [vmem:[%s2] sm:$0x1]
    %v40 = vlaneseq
    %v41 = vshrl.u32 %v40, 7
    %v42 = vsub.s32 0, %v41
    %v43 = vrot.slane %v38, %v42
    %45 = vmatprep.subr.mxu0 0.0
    %v46 = vand.u32 %v22, 4294901760
    %47 = vmatpush1.msra.mxu0 %v46
    %48 = vmatprep.subr.mxu0 0.0
    %v49 = vand.u32 %v23, 4294901760
    %50 = vmatpush1.msra.mxu0 %v49
    %51 = vmatprep.subr.mxu0 0.0
    %v52 = vand.u32 %v24, 4294901760
    %53 = vmatpush1.msra.mxu0 %v52
    %54 = vmatprep.subr.mxu0 0.0
    %v55 = vand.u32 %v25, 4294901760
    %56 = vmatpush1.msra.mxu0 %v55
    %57 = vmatprep.subr.mxu0 0.0
    %v58 = vand.u32 %v26, 4294901760
    %59 = vmatpush1.msra.mxu0 %v58
    %60 = vmatprep.subr.mxu0 0.0
    %v61 = vand.u32 %v27, 4294901760
    %62 = vmatpush1.msra.mxu0 %v61
    %63 = vmatprep.subr.mxu0 0.0
    %v64 = vand.u32 %v28, 4294901760
    %65 = vmatpush1.msra.mxu0 %v64
    %66 = vmatprep.subr.mxu0 0.0
    %v67 = vand.u32 %v29, 4294901760
    %68 = vmatpush1.msra.mxu0 %v67
    %69 = vmatprep.subr.mxu0 0.0
    %v70 = vand.u32 %v30, 4294901760
    %71 = vmatpush1.msra.mxu0 %v70
    %72 = vmatprep.subr.mxu0 0.0
    %v73 = vand.u32 %v31, 4294901760
    %74 = vmatpush1.msra.mxu0 %v73
    %75 = vmatprep.subr.mxu0 0.0
    %v76 = vand.u32 %v32, 4294901760
    %77 = vmatpush1.msra.mxu0 %v76
    %78 = vmatprep.subr.mxu0 0.0
    %v79 = vand.u32 %v33, 4294901760
    %80 = vmatpush1.msra.mxu0 %v79
    %81 = vmatprep.subr.mxu0 0.0
    %v82 = vand.u32 %v34, 4294901760
    %83 = vmatpush1.msra.mxu0 %v82
    %84 = vmatprep.subr.mxu0 0.0
    %v85 = vand.u32 %v35, 4294901760
    %86 = vmatpush1.msra.mxu0 %v85
    %87 = vmatprep.subr.mxu0 0.0
    %v88 = vand.u32 %v36, 4294901760
    %89 = vmatpush1.msra.mxu0 %v88
    %90 = vmatprep.subr.mxu0 0.0
    %v91 = vand.u32 %v37, 4294901760
    %92 = vmatpush1.msra.mxu0 %v91
    %93 = vmatprep.subr.mxu0 0.0
    %94 = vmatpush1.msra.mxu0 0.0
    %95 = vmatprep.subr.mxu0 0.0
    %96 = vmatpush1.msra.mxu0 0.0
    %97 = vmatprep.subr.mxu0 0.0
    %98 = vmatpush1.msra.mxu0 0.0
    %99 = vmatprep.subr.mxu0 0.0
    %100 = vmatpush1.msra.mxu0 0.0
    %101 = vmatprep.subr.mxu0 0.0
    %102 = vmatpush1.msra.mxu0 0.0
    %103 = vmatprep.subr.mxu0 0.0
    %104 = vmatpush1.msra.mxu0 0.0
    %105 = vmatprep.subr.mxu0 0.0
    %106 = vmatpush1.msra.mxu0 0.0
    %107 = vmatprep.subr.mxu0 0.0
    %108 = vmatpush1.msra.mxu0 0.0
    %109 = vmatprep.subr.mxu0 0.0
    %110 = vmatpush1.msra.mxu0 0.0
    %111 = vmatprep.subr.mxu0 0.0
    %112 = vmatpush1.msra.mxu0 0.0
    %113 = vmatprep.subr.mxu0 0.0
    %114 = vmatpush1.msra.mxu0 0.0
    %115 = vmatprep.subr.mxu0 0.0
    %116 = vmatpush1.msra.mxu0 0.0
    %117 = vmatprep.subr.mxu0 0.0
    %118 = vmatpush1.msra.mxu0 0.0
    %119 = vmatprep.subr.mxu0 0.0
    %120 = vmatpush1.msra.mxu0 0.0
    %121 = vmatprep.subr.mxu0 0.0
    %122 = vmatpush1.msra.mxu0 0.0
    %123 = vmatprep.subr.mxu0 0.0
    %124 = vmatpush1.msra.mxu0 0.0
    %125 = vmatprep.mubr.f32.mxu0 0.0
    %v126 = vand.u32 %v21, 4294901760
    %v127 = vsub.f32 %v21, %v126
    %v128 = vand.u32 %v127, 4294901760
    %v129 = vsub.f32 %v127, %v128
    %v130 = vand.u32 %v129, 4294901760
    %131 = vmatmul.mubr.f32.gmra.mrb[0].mxu0 %v130
    %v132 = vpop.f32.mrb[0].mxu0
    %v133 = vadd.f32 %v43, %v132
    %v134 = vpop.f32.mrb[0].mxu0
    %135 = vdwg.mxu0
    %136 = vmatprep.subr.mxu0 0.0
    %v137 = vand.u32 %v22, 4294901760
    %v138 = vsub.f32 %v22, %v137
    %v139 = vand.u32 %v138, 4294901760
    %v140 = vsub.f32 %v138, %v139
    %v141 = vand.u32 %v140, 4294901760
    %142 = vmatpush1.msra.mxu0 %v141
    %143 = vmatprep.subr.mxu0 0.0
    %v144 = vand.u32 %v23, 4294901760
    %v145 = vsub.f32 %v23, %v144
    %v146 = vand.u32 %v145, 4294901760
    %v147 = vsub.f32 %v145, %v146
    %v148 = vand.u32 %v147, 4294901760
    %149 = vmatpush1.msra.mxu0 %v148
    %150 = vmatprep.subr.mxu0 0.0
    %v151 = vand.u32 %v24, 4294901760
    %v152 = vsub.f32 %v24, %v151
    %v153 = vand.u32 %v152, 4294901760
    %v154 = vsub.f32 %v152, %v153
    %v155 = vand.u32 %v154, 4294901760
    %156 = vmatpush1.msra.mxu0 %v155
    %157 = vmatprep.subr.mxu0 0.0
    %v158 = vand.u32 %v25, 4294901760
    %v159 = vsub.f32 %v25, %v158
    %v160 = vand.u32 %v159, 4294901760
    %v161 = vsub.f32 %v159, %v160
    %v162 = vand.u32 %v161, 4294901760
    %163 = vmatpush1.msra.mxu0 %v162
    %164 = vmatprep.subr.mxu0 0.0
    %v165 = vand.u32 %v26, 4294901760
    %v166 = vsub.f32 %v26, %v165
    %v167 = vand.u32 %v166, 4294901760
    %v168 = vsub.f32 %v166, %v167
    %v169 = vand.u32 %v168, 4294901760
    %170 = vmatpush1.msra.mxu0 %v169
    %171 = vmatprep.subr.mxu0 0.0
    %v172 = vand.u32 %v27, 4294901760
    %v173 = vsub.f32 %v27, %v172
    %v174 = vand.u32 %v173, 4294901760
    %v175 = vsub.f32 %v173, %v174
    %v176 = vand.u32 %v175, 4294901760
    %177 = vmatpush1.msra.mxu0 %v176
    %178 = vmatprep.subr.mxu0 0.0
    %v179 = vand.u32 %v28, 4294901760
    %v180 = vsub.f32 %v28, %v179
    %v181 = vand.u32 %v180, 4294901760
    %v182 = vsub.f32 %v180, %v181
    %v183 = vand.u32 %v182, 4294901760
    %184 = vmatpush1.msra.mxu0 %v183
    %185 = vmatprep.subr.mxu0 0.0
    %v186 = vand.u32 %v29, 4294901760
    %v187 = vsub.f32 %v29, %v186
    %v188 = vand.u32 %v187, 4294901760
    %v189 = vsub.f32 %v187, %v188
    %v190 = vand.u32 %v189, 4294901760
    %191 = vmatpush1.msra.mxu0 %v190
    %192 = vmatprep.subr.mxu0 0.0
    %v193 = vand.u32 %v30, 4294901760
    %v194 = vsub.f32 %v30, %v193
    %v195 = vand.u32 %v194, 4294901760
    %v196 = vsub.f32 %v194, %v195
    %v197 = vand.u32 %v196, 4294901760
    %198 = vmatpush1.msra.mxu0 %v197
    %199 = vmatprep.subr.mxu0 0.0
    %v200 = vand.u32 %v31, 4294901760
    %v201 = vsub.f32 %v31, %v200
    %v202 = vand.u32 %v201, 4294901760
    %v203 = vsub.f32 %v201, %v202
    %v204 = vand.u32 %v203, 4294901760
    %205 = vmatpush1.msra.mxu0 %v204
    %206 = vmatprep.subr.mxu0 0.0
    %v207 = vand.u32 %v32, 4294901760
    %v208 = vsub.f32 %v32, %v207
    %v209 = vand.u32 %v208, 4294901760
    %v210 = vsub.f32 %v208, %v209
    %v211 = vand.u32 %v210, 4294901760
    %212 = vmatpush1.msra.mxu0 %v211
    %213 = vmatprep.subr.mxu0 0.0
    %v214 = vand.u32 %v33, 4294901760
    %v215 = vsub.f32 %v33, %v214
    %v216 = vand.u32 %v215, 4294901760
    %v217 = vsub.f32 %v215, %v216
    %v218 = vand.u32 %v217, 4294901760
    %219 = vmatpush1.msra.mxu0 %v218
    %220 = vmatprep.subr.mxu0 0.0
    %v221 = vand.u32 %v34, 4294901760
    %v222 = vsub.f32 %v34, %v221
    %v223 = vand.u32 %v222, 4294901760
    %v224 = vsub.f32 %v222, %v223
    %v225 = vand.u32 %v224, 4294901760
    %226 = vmatpush1.msra.mxu0 %v225
    %227 = vmatprep.subr.mxu0 0.0
    %v228 = vand.u32 %v35, 4294901760
    %v229 = vsub.f32 %v35, %v228
    %v230 = vand.u32 %v229, 4294901760
    %v231 = vsub.f32 %v229, %v230
    %v232 = vand.u32 %v231, 4294901760
    %233 = vmatpush1.msra.mxu0 %v232
    %234 = vmatprep.subr.mxu0 0.0
    %v235 = vand.u32 %v36, 4294901760
    %v236 = vsub.f32 %v36, %v235
    %v237 = vand.u32 %v236, 4294901760
    %v238 = vsub.f32 %v236, %v237
    %v239 = vand.u32 %v238, 4294901760
    %240 = vmatpush1.msra.mxu0 %v239
    %241 = vmatprep.subr.mxu0 0.0
    %v242 = vand.u32 %v37, 4294901760
    %v243 = vsub.f32 %v37, %v242
    %v244 = vand.u32 %v243, 4294901760
    %v245 = vsub.f32 %v243, %v244
    %v246 = vand.u32 %v245, 4294901760
    %247 = vmatpush1.msra.mxu0 %v246
    %248 = vmatprep.subr.mxu0 0.0
    %249 = vmatpush1.msra.mxu0 0.0
    %250 = vmatprep.subr.mxu0 0.0
    %251 = vmatpush1.msra.mxu0 0.0
    %252 = vmatprep.subr.mxu0 0.0
    %253 = vmatpush1.msra.mxu0 0.0
    %254 = vmatprep.subr.mxu0 0.0
    %255 = vmatpush1.msra.mxu0 0.0
    %256 = vmatprep.subr.mxu0 0.0
    %257 = vmatpush1.msra.mxu0 0.0
    %258 = vmatprep.subr.mxu0 0.0
    %259 = vmatpush1.msra.mxu0 0.0
    %260 = vmatprep.subr.mxu0 0.0
    %261 = vmatpush1.msra.mxu0 0.0
    %262 = vmatprep.subr.mxu0 0.0
    %263 = vmatpush1.msra.mxu0 0.0
    %264 = vmatprep.subr.mxu0 0.0
    %265 = vmatpush1.msra.mxu0 0.0
    %266 = vmatprep.subr.mxu0 0.0
    %267 = vmatpush1.msra.mxu0 0.0
    %268 = vmatprep.subr.mxu0 0.0
    %269 = vmatpush1.msra.mxu0 0.0
    %270 = vmatprep.subr.mxu0 0.0
    %271 = vmatpush1.msra.mxu0 0.0
    %272 = vmatprep.subr.mxu0 0.0
    %273 = vmatpush1.msra.mxu0 0.0
    %274 = vmatprep.subr.mxu0 0.0
    %275 = vmatpush1.msra.mxu0 0.0
    %276 = vmatprep.subr.mxu0 0.0
    %277 = vmatpush1.msra.mxu0 0.0
    %278 = vmatprep.subr.mxu0 0.0
    %279 = vmatpush1.msra.mxu0 0.0
    %280 = vmatprep.mubr.f32.mxu0 0.0
    %v281 = vand.u32 %v21, 4294901760
    %282 = vmatmul.mubr.f32.gmra.mrb[0].mxu0 %v281
    %v283 = vpop.f32.mrb[0].mxu0
    %v284 = vadd.f32 %v133, %v283
    %v285 = vpop.f32.mrb[0].mxu0
    %286 = vdwg.mxu0
    %287 = vmatprep.subr.mxu0 0.0
    %v288 = vand.u32 %v22, 4294901760
    %v289 = vsub.f32 %v22, %v288
    %290 = vmatpush1.msra.mxu0 %v289
    %291 = vmatprep.subr.mxu0 0.0
    %v292 = vand.u32 %v23, 4294901760
    %v293 = vsub.f32 %v23, %v292
    %294 = vmatpush1.msra.mxu0 %v293
    %295 = vmatprep.subr.mxu0 0.0
    %v296 = vand.u32 %v24, 4294901760
    %v297 = vsub.f32 %v24, %v296
    %298 = vmatpush1.msra.mxu0 %v297
    %299 = vmatprep.subr.mxu0 0.0
    %v300 = vand.u32 %v25, 4294901760
    %v301 = vsub.f32 %v25, %v300
    %302 = vmatpush1.msra.mxu0 %v301
    %303 = vmatprep.subr.mxu0 0.0
    %v304 = vand.u32 %v26, 4294901760
    %v305 = vsub.f32 %v26, %v304
    %306 = vmatpush1.msra.mxu0 %v305
    %307 = vmatprep.subr.mxu0 0.0
    %v308 = vand.u32 %v27, 4294901760
    %v309 = vsub.f32 %v27, %v308
    %310 = vmatpush1.msra.mxu0 %v309
    %311 = vmatprep.subr.mxu0 0.0
    %v312 = vand.u32 %v28, 4294901760
    %v313 = vsub.f32 %v28, %v312
    %314 = vmatpush1.msra.mxu0 %v313
    %315 = vmatprep.subr.mxu0 0.0
    %v316 = vand.u32 %v29, 4294901760
    %v317 = vsub.f32 %v29, %v316
    %318 = vmatpush1.msra.mxu0 %v317
    %319 = vmatprep.subr.mxu0 0.0
    %v320 = vand.u32 %v30, 4294901760
    %v321 = vsub.f32 %v30, %v320
    %322 = vmatpush1.msra.mxu0 %v321
    %323 = vmatprep.subr.mxu0 0.0
    %v324 = vand.u32 %v31, 4294901760
    %v325 = vsub.f32 %v31, %v324
    %326 = vmatpush1.msra.mxu0 %v325
    %327 = vmatprep.subr.mxu0 0.0
    %v328 = vand.u32 %v32, 4294901760
    %v329 = vsub.f32 %v32, %v328
    %330 = vmatpush1.msra.mxu0 %v329
    %331 = vmatprep.subr.mxu0 0.0
    %v332 = vand.u32 %v33, 4294901760
    %v333 = vsub.f32 %v33, %v332
    %334 = vmatpush1.msra.mxu0 %v333
    %335 = vmatprep.subr.mxu0 0.0
    %v336 = vand.u32 %v34, 4294901760
    %v337 = vsub.f32 %v34, %v336
    %338 = vmatpush1.msra.mxu0 %v337
    %339 = vmatprep.subr.mxu0 0.0
    %v340 = vand.u32 %v35, 4294901760
    %v341 = vsub.f32 %v35, %v340
    %342 = vmatpush1.msra.mxu0 %v341
    %343 = vmatprep.subr.mxu0 0.0
    %v344 = vand.u32 %v36, 4294901760
    %v345 = vsub.f32 %v36, %v344
    %346 = vmatpush1.msra.mxu0 %v345
    %347 = vmatprep.subr.mxu0 0.0
    %v348 = vand.u32 %v37, 4294901760
    %v349 = vsub.f32 %v37, %v348
    %350 = vmatpush1.msra.mxu0 %v349
    %351 = vmatprep.subr.mxu0 0.0
    %352 = vmatpush1.msra.mxu0 0.0
    %353 = vmatprep.subr.mxu0 0.0
    %354 = vmatpush1.msra.mxu0 0.0
    %355 = vmatprep.subr.mxu0 0.0
    %356 = vmatpush1.msra.mxu0 0.0
    %357 = vmatprep.subr.mxu0 0.0
    %358 = vmatpush1.msra.mxu0 0.0
    %359 = vmatprep.subr.mxu0 0.0
    %360 = vmatpush1.msra.mxu0 0.0
    %361 = vmatprep.subr.mxu0 0.0
    %362 = vmatpush1.msra.mxu0 0.0
    %363 = vmatprep.subr.mxu0 0.0
    %364 = vmatpush1.msra.mxu0 0.0
    %365 = vmatprep.subr.mxu0 0.0
    %366 = vmatpush1.msra.mxu0 0.0
    %367 = vmatprep.subr.mxu0 0.0
    %368 = vmatpush1.msra.mxu0 0.0
    %369 = vmatprep.subr.mxu0 0.0
    %370 = vmatpush1.msra.mxu0 0.0
    %371 = vmatprep.subr.mxu0 0.0
    %372 = vmatpush1.msra.mxu0 0.0
    %373 = vmatprep.subr.mxu0 0.0
    %374 = vmatpush1.msra.mxu0 0.0
    %375 = vmatprep.subr.mxu0 0.0
    %376 = vmatpush1.msra.mxu0 0.0
    %377 = vmatprep.subr.mxu0 0.0
    %378 = vmatpush1.msra.mxu0 0.0
    %379 = vmatprep.subr.mxu0 0.0
    %380 = vmatpush1.msra.mxu0 0.0
    %381 = vmatprep.subr.mxu0 0.0
    %382 = vmatpush1.msra.mxu0 0.0
    %383 = vmatprep.mubr.f32.mxu0 0.0
    %v384 = vand.u32 %v21, 4294901760
    %v385 = vsub.f32 %v21, %v384
    %386 = vmatmul.mubr.f32.gmra.mrb[0].mxu0 %v385
    %v387 = vpop.f32.mrb[0].mxu0
    %v388 = vadd.f32 %v284, %v387
    %v389 = vpop.f32.mrb[0].mxu0
    %390 = vdwg.mxu0
    %391 = vmatprep.subr.mxu0 0.0
    %v392 = vand.u32 %v22, 4294901760
    %393 = vmatpush1.msra.mxu0 %v392
    %394 = vmatprep.subr.mxu0 0.0
    %v395 = vand.u32 %v23, 4294901760
    %396 = vmatpush1.msra.mxu0 %v395
    %397 = vmatprep.subr.mxu0 0.0
    %v398 = vand.u32 %v24, 4294901760
    %399 = vmatpush1.msra.mxu0 %v398
    %400 = vmatprep.subr.mxu0 0.0
    %v401 = vand.u32 %v25, 4294901760
    %402 = vmatpush1.msra.mxu0 %v401
    %403 = vmatprep.subr.mxu0 0.0
    %v404 = vand.u32 %v26, 4294901760
    %405 = vmatpush1.msra.mxu0 %v404
    %406 = vmatprep.subr.mxu0 0.0
    %v407 = vand.u32 %v27, 4294901760
    %408 = vmatpush1.msra.mxu0 %v407
    %409 = vmatprep.subr.mxu0 0.0
    %v410 = vand.u32 %v28, 4294901760
    %411 = vmatpush1.msra.mxu0 %v410
    %412 = vmatprep.subr.mxu0 0.0
    %v413 = vand.u32 %v29, 4294901760
    %414 = vmatpush1.msra.mxu0 %v413
    %415 = vmatprep.subr.mxu0 0.0
    %v416 = vand.u32 %v30, 4294901760
    %417 = vmatpush1.msra.mxu0 %v416
    %418 = vmatprep.subr.mxu0 0.0
    %v419 = vand.u32 %v31, 4294901760
    %420 = vmatpush1.msra.mxu0 %v419
    %421 = vmatprep.subr.mxu0 0.0
    %v422 = vand.u32 %v32, 4294901760
    %423 = vmatpush1.msra.mxu0 %v422
    %424 = vmatprep.subr.mxu0 0.0
    %v425 = vand.u32 %v33, 4294901760
    %426 = vmatpush1.msra.mxu0 %v425
    %427 = vmatprep.subr.mxu0 0.0
    %v428 = vand.u32 %v34, 4294901760
    %429 = vmatpush1.msra.mxu0 %v428
    %430 = vmatprep.subr.mxu0 0.0
    %v431 = vand.u32 %v35, 4294901760
    %432 = vmatpush1.msra.mxu0 %v431
    %433 = vmatprep.subr.mxu0 0.0
    %v434 = vand.u32 %v36, 4294901760
    %435 = vmatpush1.msra.mxu0 %v434
    %436 = vmatprep.subr.mxu0 0.0
    %v437 = vand.u32 %v37, 4294901760
    %438 = vmatpush1.msra.mxu0 %v437
    %439 = vmatprep.subr.mxu0 0.0
    %440 = vmatpush1.msra.mxu0 0.0
    %441 = vmatprep.subr.mxu0 0.0
    %442 = vmatpush1.msra.mxu0 0.0
    %443 = vmatprep.subr.mxu0 0.0
    %444 = vmatpush1.msra.mxu0 0.0
    %445 = vmatprep.subr.mxu0 0.0
    %446 = vmatpush1.msra.mxu0 0.0
    %447 = vmatprep.subr.mxu0 0.0
    %448 = vmatpush1.msra.mxu0 0.0
    %449 = vmatprep.subr.mxu0 0.0
    %450 = vmatpush1.msra.mxu0 0.0
    %451 = vmatprep.subr.mxu0 0.0
    %452 = vmatpush1.msra.mxu0 0.0
    %453 = vmatprep.subr.mxu0 0.0
    %454 = vmatpush1.msra.mxu0 0.0
    %455 = vmatprep.subr.mxu0 0.0
    %456 = vmatpush1.msra.mxu0 0.0
    %457 = vmatprep.subr.mxu0 0.0
    %458 = vmatpush1.msra.mxu0 0.0
    %459 = vmatprep.subr.mxu0 0.0
    %460 = vmatpush1.msra.mxu0 0.0
    %461 = vmatprep.subr.mxu0 0.0
    %462 = vmatpush1.msra.mxu0 0.0
    %463 = vmatprep.subr.mxu0 0.0
    %464 = vmatpush1.msra.mxu0 0.0
    %465 = vmatprep.subr.mxu0 0.0
    %466 = vmatpush1.msra.mxu0 0.0
    %467 = vmatprep.subr.mxu0 0.0
    %468 = vmatpush1.msra.mxu0 0.0
    %469 = vmatprep.subr.mxu0 0.0
    %470 = vmatpush1.msra.mxu0 0.0
    %471 = vmatprep.mubr.f32.mxu0 0.0
    %v472 = vand.u32 %v21, 4294901760
    %v473 = vsub.f32 %v21, %v472
    %v474 = vand.u32 %v473, 4294901760
    %475 = vmatmul.mubr.f32.gmra.mrb[0].mxu0 %v474
    %v476 = vpop.f32.mrb[0].mxu0
    %v477 = vadd.f32 %v388, %v476
    %v478 = vpop.f32.mrb[0].mxu0
    %479 = vdwg.mxu0
    %480 = vmatprep.subr.mxu0 0.0
    %v481 = vand.u32 %v22, 4294901760
    %v482 = vsub.f32 %v22, %v481
    %v483 = vand.u32 %v482, 4294901760
    %484 = vmatpush1.msra.mxu0 %v483
    %485 = vmatprep.subr.mxu0 0.0
    %v486 = vand.u32 %v23, 4294901760
    %v487 = vsub.f32 %v23, %v486
    %v488 = vand.u32 %v487, 4294901760
    %489 = vmatpush1.msra.mxu0 %v488
    %490 = vmatprep.subr.mxu0 0.0
    %v491 = vand.u32 %v24, 4294901760
    %v492 = vsub.f32 %v24, %v491
    %v493 = vand.u32 %v492, 4294901760
    %494 = vmatpush1.msra.mxu0 %v493
    %495 = vmatprep.subr.mxu0 0.0
    %v496 = vand.u32 %v25, 4294901760
    %v497 = vsub.f32 %v25, %v496
    %v498 = vand.u32 %v497, 4294901760
    %499 = vmatpush1.msra.mxu0 %v498
    %500 = vmatprep.subr.mxu0 0.0
    %v501 = vand.u32 %v26, 4294901760
    %v502 = vsub.f32 %v26, %v501
    %v503 = vand.u32 %v502, 4294901760
    %504 = vmatpush1.msra.mxu0 %v503
    %505 = vmatprep.subr.mxu0 0.0
    %v506 = vand.u32 %v27, 4294901760
    %v507 = vsub.f32 %v27, %v506
    %v508 = vand.u32 %v507, 4294901760
    %509 = vmatpush1.msra.mxu0 %v508
    %510 = vmatprep.subr.mxu0 0.0
    %v511 = vand.u32 %v28, 4294901760
    %v512 = vsub.f32 %v28, %v511
    %v513 = vand.u32 %v512, 4294901760
    %514 = vmatpush1.msra.mxu0 %v513
    %515 = vmatprep.subr.mxu0 0.0
    %v516 = vand.u32 %v29, 4294901760
    %v517 = vsub.f32 %v29, %v516
    %v518 = vand.u32 %v517, 4294901760
    %519 = vmatpush1.msra.mxu0 %v518
    %520 = vmatprep.subr.mxu0 0.0
    %v521 = vand.u32 %v30, 4294901760
    %v522 = vsub.f32 %v30, %v521
    %v523 = vand.u32 %v522, 4294901760
    %524 = vmatpush1.msra.mxu0 %v523
    %525 = vmatprep.subr.mxu0 0.0
    %v526 = vand.u32 %v31, 4294901760
    %v527 = vsub.f32 %v31, %v526
    %v528 = vand.u32 %v527, 4294901760
    %529 = vmatpush1.msra.mxu0 %v528
    %530 = vmatprep.subr.mxu0 0.0
    %v531 = vand.u32 %v32, 4294901760
    %v532 = vsub.f32 %v32, %v531
    %v533 = vand.u32 %v532, 4294901760
    %534 = vmatpush1.msra.mxu0 %v533
    %535 = vmatprep.subr.mxu0 0.0
    %v536 = vand.u32 %v33, 4294901760
    %v537 = vsub.f32 %v33, %v536
    %v538 = vand.u32 %v537, 4294901760
    %539 = vmatpush1.msra.mxu0 %v538
    %540 = vmatprep.subr.mxu0 0.0
    %v541 = vand.u32 %v34, 4294901760
    %v542 = vsub.f32 %v34, %v541
    %v543 = vand.u32 %v542, 4294901760
    %544 = vmatpush1.msra.mxu0 %v543
    %545 = vmatprep.subr.mxu0 0.0
    %v546 = vand.u32 %v35, 4294901760
    %v547 = vsub.f32 %v35, %v546
    %v548 = vand.u32 %v547, 4294901760
    %549 = vmatpush1.msra.mxu0 %v548
    %550 = vmatprep.subr.mxu0 0.0
    %v551 = vand.u32 %v36, 4294901760
    %v552 = vsub.f32 %v36, %v551
    %v553 = vand.u32 %v552, 4294901760
    %554 = vmatpush1.msra.mxu0 %v553
    %555 = vmatprep.subr.mxu0 0.0
    %v556 = vand.u32 %v37, 4294901760
    %v557 = vsub.f32 %v37, %v556
    %v558 = vand.u32 %v557, 4294901760
    %559 = vmatpush1.msra.mxu0 %v558
    %560 = vmatprep.subr.mxu0 0.0
    %561 = vmatpush1.msra.mxu0 0.0
    %562 = vmatprep.subr.mxu0 0.0
    %563 = vmatpush1.msra.mxu0 0.0
    %564 = vmatprep.subr.mxu0 0.0
    %565 = vmatpush1.msra.mxu0 0.0
    %566 = vmatprep.subr.mxu0 0.0
    %567 = vmatpush1.msra.mxu0 0.0
    %568 = vmatprep.subr.mxu0 0.0
    %569 = vmatpush1.msra.mxu0 0.0
    %570 = vmatprep.subr.mxu0 0.0
    %571 = vmatpush1.msra.mxu0 0.0
    %572 = vmatprep.subr.mxu0 0.0
    %573 = vmatpush1.msra.mxu0 0.0
    %574 = vmatprep.subr.mxu0 0.0
    %575 = vmatpush1.msra.mxu0 0.0
    %576 = vmatprep.subr.mxu0 0.0
    %577 = vmatpush1.msra.mxu0 0.0
    %578 = vmatprep.subr.mxu0 0.0
    %579 = vmatpush1.msra.mxu0 0.0
    %580 = vmatprep.subr.mxu0 0.0
    %581 = vmatpush1.msra.mxu0 0.0
    %582 = vmatprep.subr.mxu0 0.0
    %583 = vmatpush1.msra.mxu0 0.0
    %584 = vmatprep.subr.mxu0 0.0
    %585 = vmatpush1.msra.mxu0 0.0
    %586 = vmatprep.subr.mxu0 0.0
    %587 = vmatpush1.msra.mxu0 0.0
    %588 = vmatprep.subr.mxu0 0.0
    %589 = vmatpush1.msra.mxu0 0.0
    %590 = vmatprep.subr.mxu0 0.0
    %591 = vmatpush1.msra.mxu0 0.0
    %592 = vmatprep.mubr.f32.mxu0 0.0
    %v593 = vand.u32 %v21, 4294901760
    %594 = vmatmul.mubr.f32.gmra.mrb[0].mxu0 %v593
    %v595 = vpop.f32.mrb[0].mxu0
    %v596 = vadd.f32 %v477, %v595
    %v597 = vpop.f32.mrb[0].mxu0
    %598 = vdwg.mxu0
    %599 = vmatprep.subr.mxu0 0.0
    %v600 = vand.u32 %v22, 4294901760
    %601 = vmatpush1.msra.mxu0 %v600
    %602 = vmatprep.subr.mxu0 0.0
    %v603 = vand.u32 %v23, 4294901760
    %604 = vmatpush1.msra.mxu0 %v603
    %605 = vmatprep.subr.mxu0 0.0
    %v606 = vand.u32 %v24, 4294901760
    %607 = vmatpush1.msra.mxu0 %v606
    %608 = vmatprep.subr.mxu0 0.0
    %v609 = vand.u32 %v25, 4294901760
    %610 = vmatpush1.msra.mxu0 %v609
    %611 = vmatprep.subr.mxu0 0.0
    %v612 = vand.u32 %v26, 4294901760
    %613 = vmatpush1.msra.mxu0 %v612
    %614 = vmatprep.subr.mxu0 0.0
    %v615 = vand.u32 %v27, 4294901760
    %616 = vmatpush1.msra.mxu0 %v615
    %617 = vmatprep.subr.mxu0 0.0
    %v618 = vand.u32 %v28, 4294901760
    %619 = vmatpush1.msra.mxu0 %v618
    %620 = vmatprep.subr.mxu0 0.0
    %v621 = vand.u32 %v29, 4294901760
    %622 = vmatpush1.msra.mxu0 %v621
    %623 = vmatprep.subr.mxu0 0.0
    %v624 = vand.u32 %v30, 4294901760
    %625 = vmatpush1.msra.mxu0 %v624
    %626 = vmatprep.subr.mxu0 0.0
    %v627 = vand.u32 %v31, 4294901760
    %628 = vmatpush1.msra.mxu0 %v627
    %629 = vmatprep.subr.mxu0 0.0
    %v630 = vand.u32 %v32, 4294901760
    %631 = vmatpush1.msra.mxu0 %v630
    %632 = vmatprep.subr.mxu0 0.0
    %v633 = vand.u32 %v33, 4294901760
    %634 = vmatpush1.msra.mxu0 %v633
    %635 = vmatprep.subr.mxu0 0.0
    %v636 = vand.u32 %v34, 4294901760
    %637 = vmatpush1.msra.mxu0 %v636
    %638 = vmatprep.subr.mxu0 0.0
    %v639 = vand.u32 %v35, 4294901760
    %640 = vmatpush1.msra.mxu0 %v639
    %641 = vmatprep.subr.mxu0 0.0
    %v642 = vand.u32 %v36, 4294901760
    %643 = vmatpush1.msra.mxu0 %v642
    %644 = vmatprep.subr.mxu0 0.0
    %v645 = vand.u32 %v37, 4294901760
    %646 = vmatpush1.msra.mxu0 %v645
    %647 = vmatprep.subr.mxu0 0.0
    %648 = vmatpush1.msra.mxu0 0.0
    %649 = vmatprep.subr.mxu0 0.0
    %650 = vmatpush1.msra.mxu0 0.0
    %651 = vmatprep.subr.mxu0 0.0
    %652 = vmatpush1.msra.mxu0 0.0
    %653 = vmatprep.subr.mxu0 0.0
    %654 = vmatpush1.msra.mxu0 0.0
    %655 = vmatprep.subr.mxu0 0.0
    %656 = vmatpush1.msra.mxu0 0.0
    %657 = vmatprep.subr.mxu0 0.0
    %658 = vmatpush1.msra.mxu0 0.0
    %659 = vmatprep.subr.mxu0 0.0
    %660 = vmatpush1.msra.mxu0 0.0
    %661 = vmatprep.subr.mxu0 0.0
    %662 = vmatpush1.msra.mxu0 0.0
    %663 = vmatprep.subr.mxu0 0.0
    %664 = vmatpush1.msra.mxu0 0.0
    %665 = vmatprep.subr.mxu0 0.0
    %666 = vmatpush1.msra.mxu0 0.0
    %667 = vmatprep.subr.mxu0 0.0
    %668 = vmatpush1.msra.mxu0 0.0
    %669 = vmatprep.subr.mxu0 0.0
    %670 = vmatpush1.msra.mxu0 0.0
    %671 = vmatprep.subr.mxu0 0.0
    %672 = vmatpush1.msra.mxu0 0.0
    %673 = vmatprep.subr.mxu0 0.0
    %674 = vmatpush1.msra.mxu0 0.0
    %675 = vmatprep.subr.mxu0 0.0
    %676 = vmatpush1.msra.mxu0 0.0
    %677 = vmatprep.subr.mxu0 0.0
    %678 = vmatpush1.msra.mxu0 0.0
    %679 = vmatprep.mubr.f32.mxu0 0.0
    %v680 = vand.u32 %v21, 4294901760
    %681 = vmatmul.mubr.f32.gmra.mrb[0].mxu0 %v680
    %v682 = vpop.f32.mrb[0].mxu0
    %v683 = vadd.f32 %v596, %v682
    %v684 = vpop.f32.mrb[0].mxu0
    %685 = vdwg.mxu0
    %v686 = vmul.f32 %v683, 0.5
    %v687 = vmul.f32 %v683, 0.70710677
    %v688 = vand.u32 2147483647, %v687
    %v689 = vmul.f32 %v688, 0.3275911
    %v690 = vadd.f32 %v689, 1.0
    %v691 = vrcp.pop %v690
    %v692 = vmul.f32 1.0, %v691
    %v693 = vmul.f32 %v692, 1.0614054
    %v694 = vadd.f32 %v693, -1.4531521
    %v695 = vmul.f32 %v692, %v694
    %v696 = vadd.f32 %v695, 1.4214138
    %v697 = vmul.f32 %v692, %v696
    %v698 = vadd.f32 %v697, -0.28449672
    %v699 = vmul.f32 %v692, %v698
    %v700 = vadd.f32 %v699, 0.2548296
    %v701 = vmul.f32 %v692, %v700
    %v702 = vsub.f32 0.0, %v688
    %v703 = vmul.f32 %v702, %v688
    %v704 = vmul.f32 %v703, 1.442695
    %v705 = vpow.pop %v704
    %v706 = vmul.f32 %v701, %v705
    %v707 = vsub.f32 1.0, %v706
    %vm708 = vcmp.lt.f32.partialorder %v687, 0.0
    %v709 = vsub.f32 0.0, %v707
    %v710 = vsel %vm708, %v709, %v707
    %v711 = vadd.f32 %v710, 1.0
    %v712 = vmul.f32 %v686, %v711
    %v713 = vld [vmem:[%s3] sm:$0xff]
    %v714 = vld [vmem:[%s3 + $0x8] sm:$0xff]
    %v715 = vld [vmem:[%s3 + $0x10] sm:$0xff]
    %v716 = vld [vmem:[%s3 + $0x18] sm:$0xff]
    %v717 = vld [vmem:[%s4] sm:$0x1]
    %v719 = vlaneseq
    %v720 = vshrl.u32 %v719, 7
    %v721 = vsub.s32 0, %v720
    %v722 = vrot.slane %v717, %v721
    %vm724 = vcmask 261120
    %v726 = vsel %vm724, %v712, 0
    %728 = vmatprep.subr.mxu0 0.0
    %v729 = vand.u32 %v713, 4294901760
    %730 = vmatpush1.msra.mxu0 %v729
    %731 = vmatprep.subr.mxu0 0.0
    %v732 = vand.u32 %v714, 4294901760
    %733 = vmatpush1.msra.mxu0 %v732
    %734 = vmatprep.subr.mxu0 0.0
    %v735 = vand.u32 %v715, 4294901760
    %736 = vmatpush1.msra.mxu0 %v735
    %737 = vmatprep.subr.mxu0 0.0
    %v738 = vand.u32 %v716, 4294901760
    %739 = vmatpush1.msra.mxu0 %v738
    %740 = vmatprep.subr.mxu0 0.0
    %741 = vmatpush1.msra.mxu0 0.0
    %742 = vmatprep.subr.mxu0 0.0
    %743 = vmatpush1.msra.mxu0 0.0
    %744 = vmatprep.subr.mxu0 0.0
    %745 = vmatpush1.msra.mxu0 0.0
    %746 = vmatprep.subr.mxu0 0.0
    %747 = vmatpush1.msra.mxu0 0.0
    %748 = vmatprep.subr.mxu0 0.0
    %749 = vmatpush1.msra.mxu0 0.0
    %750 = vmatprep.subr.mxu0 0.0
    %751 = vmatpush1.msra.mxu0 0.0
    %752 = vmatprep.subr.mxu0 0.0
    %753 = vmatpush1.msra.mxu0 0.0
    %754 = vmatprep.subr.mxu0 0.0
    %755 = vmatpush1.msra.mxu0 0.0
    %756 = vmatprep.subr.mxu0 0.0
    %757 = vmatpush1.msra.mxu0 0.0
    %758 = vmatprep.subr.mxu0 0.0
    %759 = vmatpush1.msra.mxu0 0.0
    %760 = vmatprep.subr.mxu0 0.0
    %761 = vmatpush1.msra.mxu0 0.0
    %762 = vmatprep.subr.mxu0 0.0
    %763 = vmatpush1.msra.mxu0 0.0
    %764 = vmatprep.subr.mxu0 0.0
    %765 = vmatpush1.msra.mxu0 0.0
    %766 = vmatprep.subr.mxu0 0.0
    %767 = vmatpush1.msra.mxu0 0.0
    %768 = vmatprep.subr.mxu0 0.0
    %769 = vmatpush1.msra.mxu0 0.0
    %770 = vmatprep.subr.mxu0 0.0
    %771 = vmatpush1.msra.mxu0 0.0
    %772 = vmatprep.subr.mxu0 0.0
    %773 = vmatpush1.msra.mxu0 0.0
    %774 = vmatprep.subr.mxu0 0.0
    %775 = vmatpush1.msra.mxu0 0.0
    %776 = vmatprep.subr.mxu0 0.0
    %777 = vmatpush1.msra.mxu0 0.0
    %778 = vmatprep.subr.mxu0 0.0
    %779 = vmatpush1.msra.mxu0 0.0
    %780 = vmatprep.subr.mxu0 0.0
    %781 = vmatpush1.msra.mxu0 0.0
    %782 = vmatprep.subr.mxu0 0.0
    %783 = vmatpush1.msra.mxu0 0.0
    %784 = vmatprep.subr.mxu0 0.0
    %785 = vmatpush1.msra.mxu0 0.0
    %786 = vmatprep.subr.mxu0 0.0
    %787 = vmatpush1.msra.mxu0 0.0
    %788 = vmatprep.subr.mxu0 0.0
    %789 = vmatpush1.msra.mxu0 0.0
    %790 = vmatprep.subr.mxu0 0.0
    %791 = vmatpush1.msra.mxu0 0.0
    %792 = vmatprep.subr.mxu0 0.0
    %793 = vmatpush1.msra.mxu0 0.0
    %794 = vmatprep.subr.mxu0 0.0
    %795 = vmatpush1.msra.mxu0 0.0
    %796 = vmatprep.mubr.f32.mxu0 0.0
    %v797 = vand.u32 %v726, 4294901760
    %v798 = vsub.f32 %v726, %v797
    %v799 = vand.u32 %v798, 4294901760
    %v800 = vsub.f32 %v798, %v799
    %v801 = vand.u32 %v800, 4294901760
    %802 = vmatmul.mubr.f32.gmra.mrb[0].mxu0 %v801
    %v803 = vpop.f32.mrb[0].mxu0
    %v804 = vadd.f32 %v722, %v803
    %v805 = vpop.f32.mrb[0].mxu0
    %806 = vdwg.mxu0
    %807 = vmatprep.subr.mxu0 0.0
    %v808 = vand.u32 %v713, 4294901760
    %v809 = vsub.f32 %v713, %v808
    %v810 = vand.u32 %v809, 4294901760
    %v811 = vsub.f32 %v809, %v810
    %v812 = vand.u32 %v811, 4294901760
    %813 = vmatpush1.msra.mxu0 %v812
    %814 = vmatprep.subr.mxu0 0.0
    %v815 = vand.u32 %v714, 4294901760
    %v816 = vsub.f32 %v714, %v815
    %v817 = vand.u32 %v816, 4294901760
    %v818 = vsub.f32 %v816, %v817
    %v819 = vand.u32 %v818, 4294901760
    %820 = vmatpush1.msra.mxu0 %v819
    %821 = vmatprep.subr.mxu0 0.0
    %v822 = vand.u32 %v715, 4294901760
    %v823 = vsub.f32 %v715, %v822
    %v824 = vand.u32 %v823, 4294901760
    %v825 = vsub.f32 %v823, %v824
    %v826 = vand.u32 %v825, 4294901760
    %827 = vmatpush1.msra.mxu0 %v826
    %828 = vmatprep.subr.mxu0 0.0
    %v829 = vand.u32 %v716, 4294901760
    %v830 = vsub.f32 %v716, %v829
    %v831 = vand.u32 %v830, 4294901760
    %v832 = vsub.f32 %v830, %v831
    %v833 = vand.u32 %v832, 4294901760
    %834 = vmatpush1.msra.mxu0 %v833
    %835 = vmatprep.subr.mxu0 0.0
    %836 = vmatpush1.msra.mxu0 0.0
    %837 = vmatprep.subr.mxu0 0.0
    %838 = vmatpush1.msra.mxu0 0.0
    %839 = vmatprep.subr.mxu0 0.0
    %840 = vmatpush1.msra.mxu0 0.0
    %841 = vmatprep.subr.mxu0 0.0
    %842 = vmatpush1.msra.mxu0 0.0
    %843 = vmatprep.subr.mxu0 0.0
    %844 = vmatpush1.msra.mxu0 0.0
    %845 = vmatprep.subr.mxu0 0.0
    %846 = vmatpush1.msra.mxu0 0.0
    %847 = vmatprep.subr.mxu0 0.0
    %848 = vmatpush1.msra.mxu0 0.0
    %849 = vmatprep.subr.mxu0 0.0
    %850 = vmatpush1.msra.mxu0 0.0
    %851 = vmatprep.subr.mxu0 0.0
    %852 = vmatpush1.msra.mxu0 0.0
    %853 = vmatprep.subr.mxu0 0.0
    %854 = vmatpush1.msra.mxu0 0.0
    %855 = vmatprep.subr.mxu0 0.0
    %856 = vmatpush1.msra.mxu0 0.0
    %857 = vmatprep.subr.mxu0 0.0
    %858 = vmatpush1.msra.mxu0 0.0
    %859 = vmatprep.subr.mxu0 0.0
    %860 = vmatpush1.msra.mxu0 0.0
    %861 = vmatprep.subr.mxu0 0.0
    %862 = vmatpush1.msra.mxu0 0.0
    %863 = vmatprep.subr.mxu0 0.0
    %864 = vmatpush1.msra.mxu0 0.0
    %865 = vmatprep.subr.mxu0 0.0
    %866 = vmatpush1.msra.mxu0 0.0
    %867 = vmatprep.subr.mxu0 0.0
    %868 = vmatpush1.msra.mxu0 0.0
    %869 = vmatprep.subr.mxu0 0.0
    %870 = vmatpush1.msra.mxu0 0.0
    %871 = vmatprep.subr.mxu0 0.0
    %872 = vmatpush1.msra.mxu0 0.0
    %873 = vmatprep.subr.mxu0 0.0
    %874 = vmatpush1.msra.mxu0 0.0
    %875 = vmatprep.subr.mxu0 0.0
    %876 = vmatpush1.msra.mxu0 0.0
    %877 = vmatprep.subr.mxu0 0.0
    %878 = vmatpush1.msra.mxu0 0.0
    %879 = vmatprep.subr.mxu0 0.0
    %880 = vmatpush1.msra.mxu0 0.0
    %881 = vmatprep.subr.mxu0 0.0
    %882 = vmatpush1.msra.mxu0 0.0
    %883 = vmatprep.subr.mxu0 0.0
    %884 = vmatpush1.msra.mxu0 0.0
    %885 = vmatprep.subr.mxu0 0.0
    %886 = vmatpush1.msra.mxu0 0.0
    %887 = vmatprep.subr.mxu0 0.0
    %888 = vmatpush1.msra.mxu0 0.0
    %889 = vmatprep.subr.mxu0 0.0
    %890 = vmatpush1.msra.mxu0 0.0
    %891 = vmatprep.mubr.f32.mxu0 0.0
    %v892 = vand.u32 %v726, 4294901760
    %893 = vmatmul.mubr.f32.gmra.mrb[0].mxu0 %v892
    %v894 = vpop.f32.mrb[0].mxu0
    %v895 = vadd.f32 %v804, %v894
    %v896 = vpop.f32.mrb[0].mxu0
    %897 = vdwg.mxu0
    %898 = vmatprep.subr.mxu0 0.0
    %v899 = vand.u32 %v713, 4294901760
    %v900 = vsub.f32 %v713, %v899
    %901 = vmatpush1.msra.mxu0 %v900
    %902 = vmatprep.subr.mxu0 0.0
    %v903 = vand.u32 %v714, 4294901760
    %v904 = vsub.f32 %v714, %v903
    %905 = vmatpush1.msra.mxu0 %v904
    %906 = vmatprep.subr.mxu0 0.0
    %v907 = vand.u32 %v715, 4294901760
    %v908 = vsub.f32 %v715, %v907
    %909 = vmatpush1.msra.mxu0 %v908
    %910 = vmatprep.subr.mxu0 0.0
    %v911 = vand.u32 %v716, 4294901760
    %v912 = vsub.f32 %v716, %v911
    %913 = vmatpush1.msra.mxu0 %v912
    %914 = vmatprep.subr.mxu0 0.0
    %915 = vmatpush1.msra.mxu0 0.0
    %916 = vmatprep.subr.mxu0 0.0
    %917 = vmatpush1.msra.mxu0 0.0
    %918 = vmatprep.subr.mxu0 0.0
    %919 = vmatpush1.msra.mxu0 0.0
    %920 = vmatprep.subr.mxu0 0.0
    %921 = vmatpush1.msra.mxu0 0.0
    %922 = vmatprep.subr.mxu0 0.0
    %923 = vmatpush1.msra.mxu0 0.0
    %924 = vmatprep.subr.mxu0 0.0
    %925 = vmatpush1.msra.mxu0 0.0
    %926 = vmatprep.subr.mxu0 0.0
    %927 = vmatpush1.msra.mxu0 0.0
    %928 = vmatprep.subr.mxu0 0.0
    %929 = vmatpush1.msra.mxu0 0.0
    %930 = vmatprep.subr.mxu0 0.0
    %931 = vmatpush1.msra.mxu0 0.0
    %932 = vmatprep.subr.mxu0 0.0
    %933 = vmatpush1.msra.mxu0 0.0
    %934 = vmatprep.subr.mxu0 0.0
    %935 = vmatpush1.msra.mxu0 0.0
    %936 = vmatprep.subr.mxu0 0.0
    %937 = vmatpush1.msra.mxu0 0.0
    %938 = vmatprep.subr.mxu0 0.0
    %939 = vmatpush1.msra.mxu0 0.0
    %940 = vmatprep.subr.mxu0 0.0
    %941 = vmatpush1.msra.mxu0 0.0
    %942 = vmatprep.subr.mxu0 0.0
    %943 = vmatpush1.msra.mxu0 0.0
    %944 = vmatprep.subr.mxu0 0.0
    %945 = vmatpush1.msra.mxu0 0.0
    %946 = vmatprep.subr.mxu0 0.0
    %947 = vmatpush1.msra.mxu0 0.0
    %948 = vmatprep.subr.mxu0 0.0
    %949 = vmatpush1.msra.mxu0 0.0
    %950 = vmatprep.subr.mxu0 0.0
    %951 = vmatpush1.msra.mxu0 0.0
    %952 = vmatprep.subr.mxu0 0.0
    %953 = vmatpush1.msra.mxu0 0.0
    %954 = vmatprep.subr.mxu0 0.0
    %955 = vmatpush1.msra.mxu0 0.0
    %956 = vmatprep.subr.mxu0 0.0
    %957 = vmatpush1.msra.mxu0 0.0
    %958 = vmatprep.subr.mxu0 0.0
    %959 = vmatpush1.msra.mxu0 0.0
    %960 = vmatprep.subr.mxu0 0.0
    %961 = vmatpush1.msra.mxu0 0.0
    %962 = vmatprep.subr.mxu0 0.0
    %963 = vmatpush1.msra.mxu0 0.0
    %964 = vmatprep.subr.mxu0 0.0
    %965 = vmatpush1.msra.mxu0 0.0
    %966 = vmatprep.subr.mxu0 0.0
    %967 = vmatpush1.msra.mxu0 0.0
    %968 = vmatprep.subr.mxu0 0.0
    %969 = vmatpush1.msra.mxu0 0.0
    %970 = vmatprep.mubr.f32.mxu0 0.0
    %v971 = vand.u32 %v726, 4294901760
    %v972 = vsub.f32 %v726, %v971
    %973 = vmatmul.mubr.f32.gmra.mrb[0].mxu0 %v972
    %v974 = vpop.f32.mrb[0].mxu0
    %v975 = vadd.f32 %v895, %v974
    %v976 = vpop.f32.mrb[0].mxu0
    %977 = vdwg.mxu0
    %978 = vmatprep.subr.mxu0 0.0
    %v979 = vand.u32 %v713, 4294901760
    %980 = vmatpush1.msra.mxu0 %v979
    %981 = vmatprep.subr.mxu0 0.0
    %v982 = vand.u32 %v714, 4294901760
    %983 = vmatpush1.msra.mxu0 %v982
    %984 = vmatprep.subr.mxu0 0.0
    %v985 = vand.u32 %v715, 4294901760
    %986 = vmatpush1.msra.mxu0 %v985
    %987 = vmatprep.subr.mxu0 0.0
    %v988 = vand.u32 %v716, 4294901760
    %989 = vmatpush1.msra.mxu0 %v988
    %990 = vmatprep.subr.mxu0 0.0
    %991 = vmatpush1.msra.mxu0 0.0
    %992 = vmatprep.subr.mxu0 0.0
    %993 = vmatpush1.msra.mxu0 0.0
    %994 = vmatprep.subr.mxu0 0.0
    %995 = vmatpush1.msra.mxu0 0.0
    %996 = vmatprep.subr.mxu0 0.0
    %997 = vmatpush1.msra.mxu0 0.0
    %998 = vmatprep.subr.mxu0 0.0
    %999 = vmatpush1.msra.mxu0 0.0
    %1000 = vmatprep.subr.mxu0 0.0
    %1001 = vmatpush1.msra.mxu0 0.0
    %1002 = vmatprep.subr.mxu0 0.0
    %1003 = vmatpush1.msra.mxu0 0.0
    %1004 = vmatprep.subr.mxu0 0.0
    %1005 = vmatpush1.msra.mxu0 0.0
    %1006 = vmatprep.subr.mxu0 0.0
    %1007 = vmatpush1.msra.mxu0 0.0
    %1008 = vmatprep.subr.mxu0 0.0
    %1009 = vmatpush1.msra.mxu0 0.0
    %1010 = vmatprep.subr.mxu0 0.0
    %1011 = vmatpush1.msra.mxu0 0.0
    %1012 = vmatprep.subr.mxu0 0.0
    %1013 = vmatpush1.msra.mxu0 0.0
    %1014 = vmatprep.subr.mxu0 0.0
    %1015 = vmatpush1.msra.mxu0 0.0
    %1016 = vmatprep.subr.mxu0 0.0
    %1017 = vmatpush1.msra.mxu0 0.0
    %1018 = vmatprep.subr.mxu0 0.0
    %1019 = vmatpush1.msra.mxu0 0.0
    %1020 = vmatprep.subr.mxu0 0.0
    %1021 = vmatpush1.msra.mxu0 0.0
    %1022 = vmatprep.subr.mxu0 0.0
    %1023 = vmatpush1.msra.mxu0 0.0
    %1024 = vmatprep.subr.mxu0 0.0
    %1025 = vmatpush1.msra.mxu0 0.0
    %1026 = vmatprep.subr.mxu0 0.0
    %1027 = vmatpush1.msra.mxu0 0.0
    %1028 = vmatprep.subr.mxu0 0.0
    %1029 = vmatpush1.msra.mxu0 0.0
    %1030 = vmatprep.subr.mxu0 0.0
    %1031 = vmatpush1.msra.mxu0 0.0
    %1032 = vmatprep.subr.mxu0 0.0
    %1033 = vmatpush1.msra.mxu0 0.0
    %1034 = vmatprep.subr.mxu0 0.0
    %1035 = vmatpush1.msra.mxu0 0.0
    %1036 = vmatprep.subr.mxu0 0.0
    %1037 = vmatpush1.msra.mxu0 0.0
    %1038 = vmatprep.subr.mxu0 0.0
    %1039 = vmatpush1.msra.mxu0 0.0
    %1040 = vmatprep.subr.mxu0 0.0
    %1041 = vmatpush1.msra.mxu0 0.0
    %1042 = vmatprep.subr.mxu0 0.0
    %1043 = vmatpush1.msra.mxu0 0.0
    %1044 = vmatprep.subr.mxu0 0.0
    %1045 = vmatpush1.msra.mxu0 0.0
    %1046 = vmatprep.mubr.f32.mxu0 0.0
    %v1047 = vand.u32 %v726, 4294901760
    %v1048 = vsub.f32 %v726, %v1047
    %v1049 = vand.u32 %v1048, 4294901760
    %1050 = vmatmul.mubr.f32.gmra.mrb[0].mxu0 %v1049
    %v1051 = vpop.f32.mrb[0].mxu0
    %v1052 = vadd.f32 %v975, %v1051
    %v1053 = vpop.f32.mrb[0].mxu0
    %1054 = vdwg.mxu0
    %1055 = vmatprep.subr.mxu0 0.0
    %v1056 = vand.u32 %v713, 4294901760
    %v1057 = vsub.f32 %v713, %v1056
    %v1058 = vand.u32 %v1057, 4294901760
    %1059 = vmatpush1.msra.mxu0 %v1058
    %1060 = vmatprep.subr.mxu0 0.0
    %v1061 = vand.u32 %v714, 4294901760
    %v1062 = vsub.f32 %v714, %v1061
    %v1063 = vand.u32 %v1062, 4294901760
    %1064 = vmatpush1.msra.mxu0 %v1063
    %1065 = vmatprep.subr.mxu0 0.0
    %v1066 = vand.u32 %v715, 4294901760
    %v1067 = vsub.f32 %v715, %v1066
    %v1068 = vand.u32 %v1067, 4294901760
    %1069 = vmatpush1.msra.mxu0 %v1068
    %1070 = vmatprep.subr.mxu0 0.0
    %v1071 = vand.u32 %v716, 4294901760
    %v1072 = vsub.f32 %v716, %v1071
    %v1073 = vand.u32 %v1072, 4294901760
    %1074 = vmatpush1.msra.mxu0 %v1073
    %1075 = vmatprep.subr.mxu0 0.0
    %1076 = vmatpush1.msra.mxu0 0.0
    %1077 = vmatprep.subr.mxu0 0.0
    %1078 = vmatpush1.msra.mxu0 0.0
    %1079 = vmatprep.subr.mxu0 0.0
    %1080 = vmatpush1.msra.mxu0 0.0
    %1081 = vmatprep.subr.mxu0 0.0
    %1082 = vmatpush1.msra.mxu0 0.0
    %1083 = vmatprep.subr.mxu0 0.0
    %1084 = vmatpush1.msra.mxu0 0.0
    %1085 = vmatprep.subr.mxu0 0.0
    %1086 = vmatpush1.msra.mxu0 0.0
    %1087 = vmatprep.subr.mxu0 0.0
    %1088 = vmatpush1.msra.mxu0 0.0
    %1089 = vmatprep.subr.mxu0 0.0
    %1090 = vmatpush1.msra.mxu0 0.0
    %1091 = vmatprep.subr.mxu0 0.0
    %1092 = vmatpush1.msra.mxu0 0.0
    %1093 = vmatprep.subr.mxu0 0.0
    %1094 = vmatpush1.msra.mxu0 0.0
    %1095 = vmatprep.subr.mxu0 0.0
    %1096 = vmatpush1.msra.mxu0 0.0
    %1097 = vmatprep.subr.mxu0 0.0
    %1098 = vmatpush1.msra.mxu0 0.0
    %1099 = vmatprep.subr.mxu0 0.0
    %1100 = vmatpush1.msra.mxu0 0.0
    %1101 = vmatprep.subr.mxu0 0.0
    %1102 = vmatpush1.msra.mxu0 0.0
    %1103 = vmatprep.subr.mxu0 0.0
    %1104 = vmatpush1.msra.mxu0 0.0
    %1105 = vmatprep.subr.mxu0 0.0
    %1106 = vmatpush1.msra.mxu0 0.0
    %1107 = vmatprep.subr.mxu0 0.0
    %1108 = vmatpush1.msra.mxu0 0.0
    %1109 = vmatprep.subr.mxu0 0.0
    %1110 = vmatpush1.msra.mxu0 0.0
    %1111 = vmatprep.subr.mxu0 0.0
    %1112 = vmatpush1.msra.mxu0 0.0
    %1113 = vmatprep.subr.mxu0 0.0
    %1114 = vmatpush1.msra.mxu0 0.0
    %1115 = vmatprep.subr.mxu0 0.0
    %1116 = vmatpush1.msra.mxu0 0.0
    %1117 = vmatprep.subr.mxu0 0.0
    %1118 = vmatpush1.msra.mxu0 0.0
    %1119 = vmatprep.subr.mxu0 0.0
    %1120 = vmatpush1.msra.mxu0 0.0
    %1121 = vmatprep.subr.mxu0 0.0
    %1122 = vmatpush1.msra.mxu0 0.0
    %1123 = vmatprep.subr.mxu0 0.0
    %1124 = vmatpush1.msra.mxu0 0.0
    %1125 = vmatprep.subr.mxu0 0.0
    %1126 = vmatpush1.msra.mxu0 0.0
    %1127 = vmatprep.subr.mxu0 0.0
    %1128 = vmatpush1.msra.mxu0 0.0
    %1129 = vmatprep.subr.mxu0 0.0
    %1130 = vmatpush1.msra.mxu0 0.0
    %1131 = vmatprep.mubr.f32.mxu0 0.0
    %v1132 = vand.u32 %v726, 4294901760
    %1133 = vmatmul.mubr.f32.gmra.mrb[0].mxu0 %v1132
    %v1134 = vpop.f32.mrb[0].mxu0
    %v1135 = vadd.f32 %v1052, %v1134
    %v1136 = vpop.f32.mrb[0].mxu0
    %1137 = vdwg.mxu0
    %1138 = vmatprep.subr.mxu0 0.0
    %v1139 = vand.u32 %v713, 4294901760
    %1140 = vmatpush1.msra.mxu0 %v1139
    %1141 = vmatprep.subr.mxu0 0.0
    %v1142 = vand.u32 %v714, 4294901760
    %1143 = vmatpush1.msra.mxu0 %v1142
    %1144 = vmatprep.subr.mxu0 0.0
    %v1145 = vand.u32 %v715, 4294901760
    %1146 = vmatpush1.msra.mxu0 %v1145
    %1147 = vmatprep.subr.mxu0 0.0
    %v1148 = vand.u32 %v716, 4294901760
    %1149 = vmatpush1.msra.mxu0 %v1148
    %1150 = vmatprep.subr.mxu0 0.0
    %1151 = vmatpush1.msra.mxu0 0.0
    %1152 = vmatprep.subr.mxu0 0.0
    %1153 = vmatpush1.msra.mxu0 0.0
    %1154 = vmatprep.subr.mxu0 0.0
    %1155 = vmatpush1.msra.mxu0 0.0
    %1156 = vmatprep.subr.mxu0 0.0
    %1157 = vmatpush1.msra.mxu0 0.0
    %1158 = vmatprep.subr.mxu0 0.0
    %1159 = vmatpush1.msra.mxu0 0.0
    %1160 = vmatprep.subr.mxu0 0.0
    %1161 = vmatpush1.msra.mxu0 0.0
    %1162 = vmatprep.subr.mxu0 0.0
    %1163 = vmatpush1.msra.mxu0 0.0
    %1164 = vmatprep.subr.mxu0 0.0
    %1165 = vmatpush1.msra.mxu0 0.0
    %1166 = vmatprep.subr.mxu0 0.0
    %1167 = vmatpush1.msra.mxu0 0.0
    %1168 = vmatprep.subr.mxu0 0.0
    %1169 = vmatpush1.msra.mxu0 0.0
    %1170 = vmatprep.subr.mxu0 0.0
    %1171 = vmatpush1.msra.mxu0 0.0
    %1172 = vmatprep.subr.mxu0 0.0
    %1173 = vmatpush1.msra.mxu0 0.0
    %1174 = vmatprep.subr.mxu0 0.0
    %1175 = vmatpush1.msra.mxu0 0.0
    %1176 = vmatprep.subr.mxu0 0.0
    %1177 = vmatpush1.msra.mxu0 0.0
    %1178 = vmatprep.subr.mxu0 0.0
    %1179 = vmatpush1.msra.mxu0 0.0
    %1180 = vmatprep.subr.mxu0 0.0
    %1181 = vmatpush1.msra.mxu0 0.0
    %1182 = vmatprep.subr.mxu0 0.0
    %1183 = vmatpush1.msra.mxu0 0.0
    %1184 = vmatprep.subr.mxu0 0.0
    %1185 = vmatpush1.msra.mxu0 0.0
    %1186 = vmatprep.subr.mxu0 0.0
    %1187 = vmatpush1.msra.mxu0 0.0
    %1188 = vmatprep.subr.mxu0 0.0
    %1189 = vmatpush1.msra.mxu0 0.0
    %1190 = vmatprep.subr.mxu0 0.0
    %1191 = vmatpush1.msra.mxu0 0.0
    %1192 = vmatprep.subr.mxu0 0.0
    %1193 = vmatpush1.msra.mxu0 0.0
    %1194 = vmatprep.subr.mxu0 0.0
    %1195 = vmatpush1.msra.mxu0 0.0
    %1196 = vmatprep.subr.mxu0 0.0
    %1197 = vmatpush1.msra.mxu0 0.0
    %1198 = vmatprep.subr.mxu0 0.0
    %1199 = vmatpush1.msra.mxu0 0.0
    %1200 = vmatprep.subr.mxu0 0.0
    %1201 = vmatpush1.msra.mxu0 0.0
    %1202 = vmatprep.subr.mxu0 0.0
    %1203 = vmatpush1.msra.mxu0 0.0
    %1204 = vmatprep.subr.mxu0 0.0
    %1205 = vmatpush1.msra.mxu0 0.0
    %1206 = vmatprep.mubr.f32.mxu0 0.0
    %v1207 = vand.u32 %v726, 4294901760
    %1208 = vmatmul.mubr.f32.gmra.mrb[0].mxu0 %v1207
    %v1209 = vpop.f32.mrb[0].mxu0
    %v1210 = vadd.f32 %v1135, %v1209
    %v1211 = vpop.f32.mrb[0].mxu0
    %1212 = vdwg.mxu0
    %1213 = vst [vmem:[#allocation2] sm:$0xf] %v1210
    // Predicated region
    $region22: #{tpu_custom_call.1} parent=1 // pred_check
      _
    $region23: #{tpu_custom_call.1} parent=1 // pred_check_branch
      %1215 = sbr.rel (0) target = $region25
    $region24: #{tpu_custom_call.1} parent=1 // pred_region
      %s1217 = ssub.s32 64, 64
      %1218 = vsyncadd [#allocation3], %s1217
      %s1220 = sshll.u32 [#allocation2], 4
      %s1221 = int_to_ptr.vmem [resolvable:$true] %s1220
      %1223 = dma.vmem_to_hbm [thread:$0]  %s1221, 64, %s5, [#allocation3]
    $region25: #{tpu_custom_call.1} parent=1 // pred_fallthru
      _
    // Predicated region
    $region26: #{tpu_custom_call.1} parent=1 // pred_check
      _
    $region27: #{tpu_custom_call.1} parent=1 // pred_check_branch
      %1225 = sbr.rel (0) target = $region29
    $region28: #{tpu_custom_call.1} parent=1 // pred_region
      %1226 = dma.done [#allocation3], 64
    $region29: #{tpu_custom_call.1} parent=1 // pred_fallthru
      _
    %1227 = vsyncpa [#allocation3], 1

</llo_original>
